<compile_context>
chip_gen: v7x
topology: tpu7x:2x2x1
jax: 0.10.0
libtpu: 0.0.40
codegen_flags: <defaults>
</compile_context>

<pallas_src>
import functools

import jax
import jax.numpy as jnp
from jax.experimental import pallas as pl
from jax.experimental.pallas import tpu as pltpu

F_IN = 10            # logical feature width of the PyTorch module
PACK = 12            # samples packed per lane-row
W = PACK * F_IN      # 120 lanes per packed row (of 128 -> ~6% lane waste)


def _round_up(n, m):
    return ((n + m - 1) // m) * m


def _mlp_kernel(x_ref, w1_ref, b1_ref, w2_ref, b2_ref, o_ref):
    # x_ref: (tb, 120) packed samples; w*_ref: (120, 120) block-diagonal (in, out);
    # b*_ref: (1, 120) tiled biases.  Plain dot + relu + dot; block-diagonal
    # structure keeps each 10-lane sample segment independent.
    x = x_ref[...]
    h = jnp.dot(x, w1_ref[...], preferred_element_type=jnp.float32)
    h = jnp.maximum(h + b1_ref[...], 0.0)
    y = jnp.dot(h, w2_ref[...], preferred_element_type=jnp.float32)
    o_ref[...] = (y + b2_ref[...]).astype(o_ref.dtype)


@functools.partial(jax.jit, static_argnames=("tile_b",))
def neural_net_forward(x, w1, b1, w2, b2, *, tile_b=4096):
    """Forward pass of NeuralNet.

    x:  (B, 10) f32
    w1: (10, 10) f32 (PyTorch layout (out, in)),  b1: (10,) f32
    w2: (10, 10) f32,                              b2: (10,) f32
    Returns (B, 10) f32.
    """
    B, F = x.shape
    assert F == F_IN

    # ---- packed-row geometry (all static) ----
    n_rows = pl.cdiv(B, PACK)                 # packed rows of real data
    nr8 = _round_up(max(n_rows, 1), 8)        # sublane alignment
    # >= 2 grid steps when there is enough work so v7x megacore gets both TCs busy.
    num_tiles = max(pl.cdiv(nr8, tile_b), 2 if nr8 > 8 else 1)
    tb = _round_up(pl.cdiv(nr8, num_tiles), 8)
    n_rows_pad = _round_up(nr8, tb)
    grid = (n_rows_pad // tb,)
    B_pad = n_rows_pad * PACK

    # Batch pad only if needed; touches narrow (B,10) rows only.  Padded samples
    # are zero rows whose (nonzero) outputs are sliced off at the end.
    if B_pad != B:
        x = jnp.pad(x, ((0, B_pad - B), (0, 0)))
    x_packed = x.reshape(n_rows_pad, W)       # free contiguous view

    # Block-diagonal weights: 12 independent copies of the 10x10 layer on the
    # diagonal; tiled biases.  Tiny one-time host-side arrays (~56 KiB each).
    eye = jnp.eye(PACK, dtype=jnp.float32)
    w1_bd = jnp.kron(eye, w1.T.astype(jnp.float32))   # (120, 120), (in, out)
    w2_bd = jnp.kron(eye, w2.T.astype(jnp.float32))
    b1_t = jnp.tile(b1.astype(jnp.float32), PACK).reshape(1, W)
    b2_t = jnp.tile(b2.astype(jnp.float32), PACK).reshape(1, W)

    cost = pl.CostEstimate(
        flops=2 * 2 * n_rows_pad * W * W,
        transcendentals=0,
        bytes_accessed=(2 * n_rows_pad * W + 2 * W * W + 2 * W) * 4,
    )

    out_packed = pl.pallas_call(
        _mlp_kernel,
        out_shape=jax.ShapeDtypeStruct((n_rows_pad, W), jnp.float32),
        grid_spec=pltpu.PrefetchScalarGridSpec(
            num_scalar_prefetch=0,
            grid=grid,
            in_specs=[
                pl.BlockSpec((tb, W), lambda i: (i, 0)),   # packed x (streamed)
                pl.BlockSpec((W, W), lambda i: (0, 0)),    # block-diag W1.T (resident)
                pl.BlockSpec((1, W), lambda i: (0, 0)),    # tiled b1   (resident)
                pl.BlockSpec((W, W), lambda i: (0, 0)),    # block-diag W2.T (resident)
                pl.BlockSpec((1, W), lambda i: (0, 0)),    # tiled b2   (resident)
            ],
            out_specs=pl.BlockSpec((tb, W), lambda i: (i, 0)),
        ),
        compiler_params=pltpu.CompilerParams(
            dimension_semantics=("parallel",),
        ),
        cost_estimate=cost,
    )(x_packed, w1_bd, b1_t, w2_bd, b2_t)

    out = out_packed.reshape(B_pad, F_IN)
    return out if B_pad == B else out[:B]


def _reference(x, w1, b1, w2, b2):
    h = jnp.maximum(x @ w1.T + b1, 0.0)
    return h @ w2.T + b2


if __name__ == "__main__":
    key = jax.random.PRNGKey(0)
    k_x, k_w1, k_b1, k_w2, k_b2 = jax.random.split(key, 5)

    F = F_IN
    # Deterministic init mimicking PyTorch Linear default: U(-1/sqrt(in), 1/sqrt(in))
    bound = 1.0 / jnp.sqrt(jnp.float32(F))
    w1 = jax.random.uniform(k_w1, (F, F), jnp.float32, -bound, bound)
    b1 = jax.random.uniform(k_b1, (F,), jnp.float32, -bound, bound)
    w2 = jax.random.uniform(k_w2, (F, F), jnp.float32, -bound, bound)
    b2 = jax.random.uniform(k_b2, (F,), jnp.float32, -bound, bound)

    # Tolerance covers TPU-default (bf16-class) MXU pass rounding on both sides.
    TOL = dict(atol=2e-3, rtol=2e-3)

    # Case 1: batch aligned to the 12-sample packing (no padding path).
    B = 96
    x = jax.random.normal(k_x, (B, F), dtype=jnp.float32)
    out = jax.block_until_ready(neural_net_forward(x, w1, b1, w2, b2))
    ref = _reference(x, w1, b1, w2, b2)
    assert out.shape == (B, F), out.shape
    assert jnp.allclose(out, ref, **TOL), "mismatch vs reference (aligned batch)"

    # Case 2: ragged batch (exercises pad + slice path).
    B2 = 7
    x2 = jax.random.normal(k_x, (B2, F), dtype=jnp.float32)
    out2 = jax.block_until_ready(neural_net_forward(x2, w1, b1, w2, b2))
    ref2 = _reference(x2, w1, b1, w2, b2)
    assert out2.shape == (B2, F), out2.shape
    assert jnp.allclose(out2, ref2, **TOL), "mismatch vs reference (ragged batch)"

    print("KERNEL_OK")
</pallas_src>

<mosaic_0001>
module attributes {stable_mosaic.version = 11 : i64} {
  func.func @_mlp_kernel(%arg0: i32, %arg1: memref<8x120xf32, #tpu.memory_space<vmem>>, %arg2: memref<120x120xf32, #tpu.memory_space<vmem>>, %arg3: memref<1x120xf32, #tpu.memory_space<vmem>>, %arg4: memref<120x120xf32, #tpu.memory_space<vmem>>, %arg5: memref<1x120xf32, #tpu.memory_space<vmem>>, %arg6: memref<8x120xf32, #tpu.memory_space<vmem>>) attributes {dimension_semantics = [#tpu.dimension_semantics<parallel>], iteration_bounds = array<i64: 1>, scalar_prefetch = 0 : i64, scratch_operands = 0 : i64, tpu.core_type = #tpu.core_type<tc>, window_params = [{transform_indices = @transform_0, window_bounds = array<i64: 8, 120>}, {pipeline_mode = #tpu.pipeline_mode<synchronous>, transform_indices = @transform_1, window_bounds = array<i64: 120, 120>}, {pipeline_mode = #tpu.pipeline_mode<synchronous>, transform_indices = @transform_2, window_bounds = array<i64: 1, 120>}, {pipeline_mode = #tpu.pipeline_mode<synchronous>, transform_indices = @transform_3, window_bounds = array<i64: 120, 120>}, {pipeline_mode = #tpu.pipeline_mode<synchronous>, transform_indices = @transform_4, window_bounds = array<i64: 1, 120>}, {transform_indices = @transform_5, window_bounds = array<i64: 8, 120>}]} {
    %c0 = arith.constant 0 : index
    %c0_0 = arith.constant 0 : index
    %0 = vector.load %arg1[%c0, %c0_0] : memref<8x120xf32, #tpu.memory_space<vmem>>, vector<8x120xf32>
    %c0_1 = arith.constant 0 : index
    %c0_2 = arith.constant 0 : index
    %1 = vector.load %arg2[%c0_1, %c0_2] : memref<120x120xf32, #tpu.memory_space<vmem>>, vector<120x120xf32>
    %cst = arith.constant dense<0.000000e+00> : vector<8x120xf32>
    %2 = tpu.matmul %0, %1, %cst {dimension_numbers = #tpu.dot_dimension_numbers<[1], [0], [0], [1], [0, 0, 1, 1], [], []>} : vector<8x120xf32>, vector<120x120xf32>, vector<8x120xf32> -> vector<8x120xf32>
    %c0_3 = arith.constant 0 : index
    %c0_4 = arith.constant 0 : index
    %3 = vector.load %arg3[%c0_3, %c0_4] : memref<1x120xf32, #tpu.memory_space<vmem>>, vector<1x120xf32>
    %4 = vector.broadcast %3 : vector<1x120xf32> to vector<8x120xf32>
    %5 = arith.addf %2, %4 : vector<8x120xf32>
    %cst_5 = arith.constant 0.000000e+00 : f32
    %6 = vector.broadcast %cst_5 : f32 to vector<8x120xf32>
    %7 = arith.maximumf %5, %6 : vector<8x120xf32>
    %c0_6 = arith.constant 0 : index
    %c0_7 = arith.constant 0 : index
    %8 = vector.load %arg4[%c0_6, %c0_7] : memref<120x120xf32, #tpu.memory_space<vmem>>, vector<120x120xf32>
    %cst_8 = arith.constant dense<0.000000e+00> : vector<8x120xf32>
    %9 = tpu.matmul %7, %8, %cst_8 {dimension_numbers = #tpu.dot_dimension_numbers<[1], [0], [0], [1], [0, 0, 1, 1], [], []>} : vector<8x120xf32>, vector<120x120xf32>, vector<8x120xf32> -> vector<8x120xf32>
    %c0_9 = arith.constant 0 : index
    %c0_10 = arith.constant 0 : index
    %10 = vector.load %arg5[%c0_9, %c0_10] : memref<1x120xf32, #tpu.memory_space<vmem>>, vector<1x120xf32>
    %11 = vector.broadcast %10 : vector<1x120xf32> to vector<8x120xf32>
    %12 = arith.addf %9, %11 : vector<8x120xf32>
    %c0_11 = arith.constant 0 : index
    %c0_12 = arith.constant 0 : index
    %13 = vector.load %arg6[%c0_11, %c0_12] : memref<8x120xf32, #tpu.memory_space<vmem>>, vector<8x120xf32>
    tpu.vector_store %arg6[%c0_11, %c0_12], %12 {strides = array<i32>} : memref<8x120xf32, #tpu.memory_space<vmem>>, vector<8x120xf32>,
    return
  }
  func.func @transform_0(%arg0: i32) -> (i32, i32) {
    %c0_i32 = arith.constant 0 : i32
    %c0_i32_0 = arith.constant 0 : i32
    return %arg0, %c0_i32 : i32, i32
  }
  func.func @transform_1(%arg0: i32) -> (i32, i32) {
    %c0_i32 = arith.constant 0 : i32
    %c0_i32_0 = arith.constant 0 : i32
    %c0_i32_1 = arith.constant 0 : i32
    return %c0_i32, %c0_i32_0 : i32, i32
  }
  func.func @transform_2(%arg0: i32) -> (i32, i32) {
    %c0_i32 = arith.constant 0 : i32
    %c0_i32_0 = arith.constant 0 : i32
    %c0_i32_1 = arith.constant 0 : i32
    return %c0_i32, %c0_i32_0 : i32, i32
  }
  func.func @transform_3(%arg0: i32) -> (i32, i32) {
    %c0_i32 = arith.constant 0 : i32
    %c0_i32_0 = arith.constant 0 : i32
    %c0_i32_1 = arith.constant 0 : i32
    return %c0_i32, %c0_i32_0 : i32, i32
  }
  func.func @transform_4(%arg0: i32) -> (i32, i32) {
    %c0_i32 = arith.constant 0 : i32
    %c0_i32_0 = arith.constant 0 : i32
    %c0_i32_1 = arith.constant 0 : i32
    return %c0_i32, %c0_i32_0 : i32, i32
  }
  func.func @transform_5(%arg0: i32) -> (i32, i32) {
    %c0_i32 = arith.constant 0 : i32
    %c0_i32_0 = arith.constant 0 : i32
    return %arg0, %c0_i32 : i32, i32
  }
}

</mosaic_0001>

<llo_original>
// kernel: tile.13
$region0: #{tile.13}
  #allocation0 [shape = 's32[1]{0}', space=sflag, size = 0x4, scoped, tag = 'scoped memory for tile.13']
  %s0 = inlined_call_operand.vmem [shape: f32[10], index: 0, kind: input, shape index: {}]
  %s1 = inlined_call_operand.vmem [shape: f32[12,10], index: 1, kind: output, shape index: {}]
  // Predicated region
  $region2: #{tile.13} parent=0 // pred_check
    _
  $region3: #{tile.13} parent=0 // pred_check_branch
    %3 = sbr.rel (0) target = $region5
  $region4: #{tile.13} parent=0 // pred_region
    _
  $region5: #{tile.13} parent=0 // pred_fallthru
    _
  %v4 = vld [vmem:[%s0] ss:$0 sm:$0xff]
  %5 = vst [vmem:[%s1] sm:$0xff] %v4
  %s6 = scalar_lea.vmem %s1, 8
  %7 = vst [vmem:[%s6] sm:$0xff] %v4

// kernel: tile.14
$region0: #{tile.14}
  %s0 = inlined_call_operand.vmem [shape: f32[12,10], index: 0, kind: input, shape index: {}]
  %s1 = inlined_call_operand.vmem [shape: f32[1,120], index: 1, kind: output, shape index: {}]
  $region1: #{tile.14} parent=0
    #allocation0 [shape = 'u8[4096]{0}', space=vmem, size = 0x1000, scoped, tag = 'scoped mem for output reshape']
    %v2 = vld [vmem:[%s0] sm:$0x1]
    %vm3 = vcmask 80896
    %4 = vst.msk [vmem:[#allocation0] sm:$0x1] %vm3, %v2
    %s5 = scalar_lea.vmem %s0, 11
    %v6 = vld [vmem:[%s5] sm:$0x1]
    %7 = vrot.lane.b32.xlu0 %v6, 110
    %v8 = vpop.permute.xlu0 %7
    %vm9 = vcmask 982896
    %10 = vst.msk [vmem:[#allocation0] sm:$0x1] %vm9, %v8
    %s11 = scalar_lea.vmem %s0, 10
    %v12 = vld [vmem:[%s11] sm:$0x1]
    %13 = vrot.lane.b32.xlu0 %v12, 100
    %v14 = vpop.permute.xlu0 %13
    %vm15 = vcmask 900896
    %16 = vst.msk [vmem:[#allocation0] sm:$0x1] %vm15, %v14
    %s17 = scalar_lea.vmem %s0, 9
    %v18 = vld [vmem:[%s17] sm:$0x1]
    %19 = vrot.lane.b32.xlu0 %v18, 90
    %v20 = vpop.permute.xlu0 %19
    %vm21 = vcmask 818896
    %22 = vst.msk [vmem:[#allocation0] sm:$0x1] %vm21, %v20
    %s23 = scalar_lea.vmem %s0, 8
    %v24 = vld [vmem:[%s23] sm:$0x1]
    %25 = vrot.lane.b32.xlu0 %v24, 80
    %v26 = vpop.permute.xlu0 %25
    %vm27 = vcmask 736896
    %28 = vst.msk [vmem:[#allocation0] sm:$0x1] %vm27, %v26
    %s29 = scalar_lea.vmem %s0, 7
    %v30 = vld [vmem:[%s29] sm:$0x1]
    %31 = vrot.lane.b32.xlu0 %v30, 70
    %v32 = vpop.permute.xlu0 %31
    %vm33 = vcmask 654896
    %34 = vst.msk [vmem:[#allocation0] sm:$0x1] %vm33, %v32
    %s35 = scalar_lea.vmem %s0, 6
    %v36 = vld [vmem:[%s35] sm:$0x1]
    %37 = vrot.lane.b32.xlu0 %v36, 60
    %v38 = vpop.permute.xlu0 %37
    %vm39 = vcmask 572896
    %40 = vst.msk [vmem:[#allocation0] sm:$0x1] %vm39, %v38
    %s41 = scalar_lea.vmem %s0, 5
    %v42 = vld [vmem:[%s41] sm:$0x1]
    %43 = vrot.lane.b32.xlu0 %v42, 50
    %v44 = vpop.permute.xlu0 %43
    %vm45 = vcmask 490896
    %46 = vst.msk [vmem:[#allocation0] sm:$0x1] %vm45, %v44
    %s47 = scalar_lea.vmem %s0, 4
    %v48 = vld [vmem:[%s47] sm:$0x1]
    %49 = vrot.lane.b32.xlu0 %v48, 40
    %v50 = vpop.permute.xlu0 %49
    %vm51 = vcmask 408896
    %52 = vst.msk [vmem:[#allocation0] sm:$0x1] %vm51, %v50
    %s53 = scalar_lea.vmem %s0, 3
    %v54 = vld [vmem:[%s53] sm:$0x1]
    %55 = vrot.lane.b32.xlu0 %v54, 30
    %v56 = vpop.permute.xlu0 %55
    %vm57 = vcmask 326896
    %58 = vst.msk [vmem:[#allocation0] sm:$0x1] %vm57, %v56
    %s59 = scalar_lea.vmem %s0, 2
    %v60 = vld [vmem:[%s59] sm:$0x1]
    %61 = vrot.lane.b32.xlu0 %v60, 20
    %v62 = vpop.permute.xlu0 %61
    %vm63 = vcmask 244896
    %64 = vst.msk [vmem:[#allocation0] sm:$0x1] %vm63, %v62
    %s65 = scalar_lea.vmem %s0, 1
    %v66 = vld [vmem:[%s65] sm:$0x1]
    %67 = vrot.lane.b32.xlu0 %v66, 10
    %v68 = vpop.permute.xlu0 %67
    %vm69 = vcmask 162896
    %70 = vst.msk [vmem:[#allocation0] sm:$0x1] %vm69, %v68
    %s72 = sshllo.u32 0, 1
    %v74 = vld [vmem:[#allocation0] sm:%s72]
    %s75 = sshllo.u32 0, 1
    %76 = vst [vmem:[%s1] sm:%s75] %v74

// kernel: neural_net_forward.1
$region0: #{neural_net_forward.1}
  #allocation0 [shape = 'u32[]', space=smem, size = 0x4, offset = 0x4, fixed_abs, tag = 'smem constant byte address 0x4 - core index']
  #allocation1 [shape = 'u32[144,128]{1,0:T(1,128)}', space=vmem, size = 0x12000, scoped, tag = 'internal scratch']
  %s0 = inlined_call_operand.vmem [shape: f32[8,120], index: 0, kind: input, shape index: {}]
  %s1 = inlined_call_operand.vmem [shape: f32[120,120], index: 1, kind: input, shape index: {}]
  %s2 = inlined_call_operand.vmem [shape: f32[1,120], index: 2, kind: input, shape index: {}]
  %s3 = inlined_call_operand.vmem [shape: f32[120,120], index: 3, kind: input, shape index: {}]
  %s4 = inlined_call_operand.vmem [shape: f32[1,120], index: 4, kind: input, shape index: {}]
  %s5 = inlined_call_operand.vmem [shape: f32[8,120], index: 5, kind: output, shape index: {}]
  %s6 = sld [smem:[#allocation0]]
  $region30: #{neural_net_forward.1} parent=0
    _
  %s8 = ssub.s32 1, %s6
  %s9 = scalar_select 0, %s8, %s6
  // Predicated region
  $region2: #{neural_net_forward.1} parent=0 // pred_check
    _
  $region3: #{neural_net_forward.1} parent=0 // pred_check_branch
    %11 = sbr.rel (0) target = $region5
  $region4: #{neural_net_forward.1} parent=0 // pred_region
    _
  $region5: #{neural_net_forward.1} parent=0 // pred_fallthru
    _
  // Predicated region
  $region6: #{neural_net_forward.1} parent=0 // pred_check
    _
  $region7: #{neural_net_forward.1} parent=0 // pred_check_branch
    %13 = sbr.rel (0) target = $region9
  $region8: #{neural_net_forward.1} parent=0 // pred_region
    _
  $region9: #{neural_net_forward.1} parent=0 // pred_fallthru
    _
  // Predicated region
  $region10: #{neural_net_forward.1} parent=0 // pred_check
    _
  $region11: #{neural_net_forward.1} parent=0 // pred_check_branch
    %15 = sbr.rel (0) target = $region13
  $region12: #{neural_net_forward.1} parent=0 // pred_region
    _
  $region13: #{neural_net_forward.1} parent=0 // pred_fallthru
    _
  // Predicated region
  $region14: #{neural_net_forward.1} parent=0 // pred_check
    _
  $region15: #{neural_net_forward.1} parent=0 // pred_check_branch
    %17 = sbr.rel (0) target = $region17
  $region16: #{neural_net_forward.1} parent=0 // pred_region
    _
  $region17: #{neural_net_forward.1} parent=0 // pred_fallthru
    _
  // Predicated region
  $region18: #{neural_net_forward.1} parent=0 // pred_check
    _
  $region19: #{neural_net_forward.1} parent=0 // pred_check_branch
    %19 = sbr.rel (0) target = $region21
  $region20: #{neural_net_forward.1} parent=0 // pred_region
    _
  $region21: #{neural_net_forward.1} parent=0 // pred_fallthru
    _
  %v20 = vld [vmem:[%s0] sm:$0xff]
  %v21 = vld [vmem:[%s1] sm:$0xff]
  %v22 = vld [vmem:[%s1 + $0x8] sm:$0xff]
  %v23 = vld [vmem:[%s1 + $0x10] sm:$0xff]
  %v24 = vld [vmem:[%s1 + $0x18] sm:$0xff]
  %v25 = vld [vmem:[%s1 + $0x20] sm:$0xff]
  %v26 = vld [vmem:[%s1 + $0x28] sm:$0xff]
  %v27 = vld [vmem:[%s1 + $0x30] sm:$0xff]
  %v28 = vld [vmem:[%s1 + $0x38] sm:$0xff]
  %v29 = vld [vmem:[%s1 + $0x40] sm:$0xff]
  %v30 = vld [vmem:[%s1 + $0x48] sm:$0xff]
  %v31 = vld [vmem:[%s1 + $0x50] sm:$0xff]
  %v32 = vld [vmem:[%s1 + $0x58] sm:$0xff]
  %v33 = vld [vmem:[%s1 + $0x60] sm:$0xff]
  %v34 = vld [vmem:[%s1 + $0x68] sm:$0xff]
  %v35 = vld [vmem:[%s1 + $0x70] sm:$0xff]
  %v36 = vld [vmem:[%s2] sm:$0x1]
  %v38 = vlaneseq
  %v39 = vshrl.u32 %v38, 7
  %v40 = vsub.s32 0, %v39
  %v41 = vrot.slane %v36, %v40
  %vm43 = vcmask 982016
  %v45 = vsel %vm43, %v20, 0
  %47 = vmatprep.subr.mxu0 0.0
  %48 = vmatpush1.msra.mxu0 %v21
  %49 = vmatprep.subr.mxu0 0.0
  %50 = vmatpush1.msra.mxu0 %v22
  %51 = vmatprep.subr.mxu0 0.0
  %52 = vmatpush1.msra.mxu0 %v23
  %53 = vmatprep.subr.mxu0 0.0
  %54 = vmatpush1.msra.mxu0 %v24
  %55 = vmatprep.subr.mxu0 0.0
  %56 = vmatpush1.msra.mxu0 %v25
  %57 = vmatprep.subr.mxu0 0.0
  %58 = vmatpush1.msra.mxu0 %v26
  %59 = vmatprep.subr.mxu0 0.0
  %60 = vmatpush1.msra.mxu0 %v27
  %61 = vmatprep.subr.mxu0 0.0
  %62 = vmatpush1.msra.mxu0 %v28
  %63 = vmatprep.subr.mxu0 0.0
  %64 = vmatpush1.msra.mxu0 %v29
  %65 = vmatprep.subr.mxu0 0.0
  %66 = vmatpush1.msra.mxu0 %v30
  %67 = vmatprep.subr.mxu0 0.0
  %68 = vmatpush1.msra.mxu0 %v31
  %69 = vmatprep.subr.mxu0 0.0
  %70 = vmatpush1.msra.mxu0 %v32
  %71 = vmatprep.subr.mxu0 0.0
  %72 = vmatpush1.msra.mxu0 %v33
  %73 = vmatprep.subr.mxu0 0.0
  %74 = vmatpush1.msra.mxu0 %v34
  %75 = vmatprep.subr.mxu0 0.0
  %76 = vmatpush1.msra.mxu0 %v35
  %77 = vmatprep.subr.mxu0 0.0
  %78 = vmatpush1.msra.mxu0 0.0
  %79 = vmatprep.subr.mxu0 0.0
  %80 = vmatpush1.msra.mxu0 0.0
  %81 = vmatprep.subr.mxu0 0.0
  %82 = vmatpush1.msra.mxu0 0.0
  %83 = vmatprep.subr.mxu0 0.0
  %84 = vmatpush1.msra.mxu0 0.0
  %85 = vmatprep.subr.mxu0 0.0
  %86 = vmatpush1.msra.mxu0 0.0
  %87 = vmatprep.subr.mxu0 0.0
  %88 = vmatpush1.msra.mxu0 0.0
  %89 = vmatprep.subr.mxu0 0.0
  %90 = vmatpush1.msra.mxu0 0.0
  %91 = vmatprep.subr.mxu0 0.0
  %92 = vmatpush1.msra.mxu0 0.0
  %93 = vmatprep.subr.mxu0 0.0
  %94 = vmatpush1.msra.mxu0 0.0
  %95 = vmatprep.subr.mxu0 0.0
  %96 = vmatpush1.msra.mxu0 0.0
  %97 = vmatprep.subr.mxu0 0.0
  %98 = vmatpush1.msra.mxu0 0.0
  %99 = vmatprep.subr.mxu0 0.0
  %100 = vmatpush1.msra.mxu0 0.0
  %101 = vmatprep.subr.mxu0 0.0
  %102 = vmatpush1.msra.mxu0 0.0
  %103 = vmatprep.subr.mxu0 0.0
  %104 = vmatpush1.msra.mxu0 0.0
  %105 = vmatprep.subr.mxu0 0.0
  %106 = vmatpush1.msra.mxu0 0.0
  %107 = vmatprep.subr.mxu0 0.0
  %108 = vmatpush1.msra.mxu0 0.0
  %109 = vmatprep.subr.mxu0 0.0
  %110 = vmatpush1.msra.mxu0 0.0
  %111 = vmatprep.mubr.f32.mxu0 0.0
  %112 = vmatmul.mubr.f32.gmra.mrb[0].mxu0 %v45
  %v113 = vpop.f32.mrb[0].mxu0
  %v114 = vadd.f32 %v41, %v113
  %v115 = vpop.f32.mrb[0].mxu0
  %116 = vdwg.mxu0
  %v117 = vmax.f32 %v114, 0.0
  %v118 = vld [vmem:[%s3] sm:$0xff]
  %v119 = vld [vmem:[%s3 + $0x8] sm:$0xff]
  %v120 = vld [vmem:[%s3 + $0x10] sm:$0xff]
  %v121 = vld [vmem:[%s3 + $0x18] sm:$0xff]
  %v122 = vld [vmem:[%s3 + $0x20] sm:$0xff]
  %v123 = vld [vmem:[%s3 + $0x28] sm:$0xff]
  %v124 = vld [vmem:[%s3 + $0x30] sm:$0xff]
  %v125 = vld [vmem:[%s3 + $0x38] sm:$0xff]
  %v126 = vld [vmem:[%s3 + $0x40] sm:$0xff]
  %v127 = vld [vmem:[%s3 + $0x48] sm:$0xff]
  %v128 = vld [vmem:[%s3 + $0x50] sm:$0xff]
  %v129 = vld [vmem:[%s3 + $0x58] sm:$0xff]
  %v130 = vld [vmem:[%s3 + $0x60] sm:$0xff]
  %v131 = vld [vmem:[%s3 + $0x68] sm:$0xff]
  %v132 = vld [vmem:[%s3 + $0x70] sm:$0xff]
  %v133 = vld [vmem:[%s4] sm:$0x1]
  %v135 = vlaneseq
  %v136 = vshrl.u32 %v135, 7
  %v137 = vsub.s32 0, %v136
  %v138 = vrot.slane %v133, %v137
  %v141 = vsel %vm43, %v117, 0
  %143 = vmatprep.subr.mxu0 0.0
  %144 = vmatpush1.msra.mxu0 %v118
  %145 = vmatprep.subr.mxu0 0.0
  %146 = vmatpush1.msra.mxu0 %v119
  %147 = vmatprep.subr.mxu0 0.0
  %148 = vmatpush1.msra.mxu0 %v120
  %149 = vmatprep.subr.mxu0 0.0
  %150 = vmatpush1.msra.mxu0 %v121
  %151 = vmatprep.subr.mxu0 0.0
  %152 = vmatpush1.msra.mxu0 %v122
  %153 = vmatprep.subr.mxu0 0.0
  %154 = vmatpush1.msra.mxu0 %v123
  %155 = vmatprep.subr.mxu0 0.0
  %156 = vmatpush1.msra.mxu0 %v124
  %157 = vmatprep.subr.mxu0 0.0
  %158 = vmatpush1.msra.mxu0 %v125
  %159 = vmatprep.subr.mxu0 0.0
  %160 = vmatpush1.msra.mxu0 %v126
  %161 = vmatprep.subr.mxu0 0.0
  %162 = vmatpush1.msra.mxu0 %v127
  %163 = vmatprep.subr.mxu0 0.0
  %164 = vmatpush1.msra.mxu0 %v128
  %165 = vmatprep.subr.mxu0 0.0
  %166 = vmatpush1.msra.mxu0 %v129
  %167 = vmatprep.subr.mxu0 0.0
  %168 = vmatpush1.msra.mxu0 %v130
  %169 = vmatprep.subr.mxu0 0.0
  %170 = vmatpush1.msra.mxu0 %v131
  %171 = vmatprep.subr.mxu0 0.0
  %172 = vmatpush1.msra.mxu0 %v132
  %173 = vmatprep.subr.mxu0 0.0
  %174 = vmatpush1.msra.mxu0 0.0
  %175 = vmatprep.subr.mxu0 0.0
  %176 = vmatpush1.msra.mxu0 0.0
  %177 = vmatprep.subr.mxu0 0.0
  %178 = vmatpush1.msra.mxu0 0.0
  %179 = vmatprep.subr.mxu0 0.0
  %180 = vmatpush1.msra.mxu0 0.0
  %181 = vmatprep.subr.mxu0 0.0
  %182 = vmatpush1.msra.mxu0 0.0
  %183 = vmatprep.subr.mxu0 0.0
  %184 = vmatpush1.msra.mxu0 0.0
  %185 = vmatprep.subr.mxu0 0.0
  %186 = vmatpush1.msra.mxu0 0.0
  %187 = vmatprep.subr.mxu0 0.0
  %188 = vmatpush1.msra.mxu0 0.0
  %189 = vmatprep.subr.mxu0 0.0
  %190 = vmatpush1.msra.mxu0 0.0
  %191 = vmatprep.subr.mxu0 0.0
  %192 = vmatpush1.msra.mxu0 0.0
  %193 = vmatprep.subr.mxu0 0.0
  %194 = vmatpush1.msra.mxu0 0.0
  %195 = vmatprep.subr.mxu0 0.0
  %196 = vmatpush1.msra.mxu0 0.0
  %197 = vmatprep.subr.mxu0 0.0
  %198 = vmatpush1.msra.mxu0 0.0
  %199 = vmatprep.subr.mxu0 0.0
  %200 = vmatpush1.msra.mxu0 0.0
  %201 = vmatprep.subr.mxu0 0.0
  %202 = vmatpush1.msra.mxu0 0.0
  %203 = vmatprep.subr.mxu0 0.0
  %204 = vmatpush1.msra.mxu0 0.0
  %205 = vmatprep.subr.mxu0 0.0
  %206 = vmatpush1.msra.mxu0 0.0
  %207 = vmatprep.mubr.f32.mxu0 0.0
  %208 = vmatmul.mubr.f32.gmra.mrb[0].mxu0 %v141
  %v209 = vpop.f32.mrb[0].mxu0
  %v210 = vadd.f32 %v138, %v209
  %v211 = vpop.f32.mrb[0].mxu0
  %212 = vdwg.mxu0
  %213 = vst.msk [vmem:[%s5] sm:$0xff] %vm43, %v210
  // Predicated region
  $region22: #{neural_net_forward.1} parent=0 // pred_check
    _
  $region23: #{neural_net_forward.1} parent=0 // pred_check_branch
    %215 = sbr.rel (0) target = $region25
  $region24: #{neural_net_forward.1} parent=0 // pred_region
    _
  $region25: #{neural_net_forward.1} parent=0 // pred_fallthru
    _
  // Predicated region
  $region26: #{neural_net_forward.1} parent=0 // pred_check
    _
  $region27: #{neural_net_forward.1} parent=0 // pred_check_branch
    %217 = sbr.rel (0) target = $region29
  $region28: #{neural_net_forward.1} parent=0 // pred_region
    _
  $region29: #{neural_net_forward.1} parent=0 // pred_fallthru
    _

</llo_original>
